<compile_context>
chip_gen: v5e
topology: v5e:2x2
jax: 0.10.0
libtpu: 0.0.40
codegen_flags: <defaults>
</compile_context>

<pallas_src>
import functools

import jax
import jax.numpy as jnp
from jax.experimental import pallas as pl
from jax.experimental.pallas import tpu as pltpu

FILTER_SIZES = (2, 3, 4, 5)
FS_MAX = max(FILTER_SIZES)


def _round_up(x, m):
    return (x + m - 1) // m * m


# ----------------------------------------------------------------------------
# Pallas kernel (one batch tile per grid step):
#   emb_ref   : (TB, L_src, E)     bf16  gathered embeddings (L_src = lout_pad+FS_MAX-1)
#   w_ref     : (FS_MAX, E, 4C)    bf16  4 conv filters packed along channels,
#                                        BN scale folded in, zero past each fs
#   shift_ref : (1, 4C)            f32   conv_bias*bn_scale + bn_shift (folded)
#   vlen_ref  : (1, 4C)            i32   valid conv positions per channel group
#   feat_ref  : (TB, 4C)           f32   max-over-time pooled features (output)
# ----------------------------------------------------------------------------
def textcnn_kernel(emb_ref, w_ref, shift_ref, vlen_ref, feat_ref, *, lout_pad):
    tb, _, e = emb_ref.shape
    fs_max, _, n_c = w_ref.shape
    rows = tb * lout_pad

    # Convolutions as FS_MAX shifted, accumulating MXU matmuls (f32 accumulate).
    acc = jnp.zeros((rows, n_c), jnp.float32)
    for j in range(fs_max):                      # static unroll
        win = emb_ref[:, j:j + lout_pad, :].reshape(rows, e)          # (rows, E)
        acc = acc + jnp.dot(win, w_ref[j], preferred_element_type=jnp.float32)

    # Folded conv-bias + eval-mode BatchNorm shift, then ReLU (f32 on the VPU).
    y = jnp.maximum(acc + shift_ref[...], 0.0)                        # (rows, 4C)

    # In-kernel validity mask: position p is valid for filter fs iff p <= L-fs.
    # ReLU output is >= 0 and every filter has >= 1 valid position, so zeroing
    # the invalid tail never changes the max over valid positions.
    pos = jax.lax.broadcasted_iota(jnp.int32, (lout_pad, n_c), 0)
    valid = pos < vlen_ref[...]                                       # (lout_pad, 4C)
    y = jnp.where(valid[None], y.reshape(tb, lout_pad, n_c), 0.0)

    # max-over-time; dropout is identity at inference.
    feat_ref[...] = jnp.max(y, axis=1).astype(feat_ref.dtype)         # (TB, 4C)


# ----------------------------------------------------------------------------
# Wrapper: embedding gather + weight packing in JAX glue, one pallas_call with
# batch tiles on a parallel grid, tiny 4C->1 FC done lane-dense in the wrapper.
# ----------------------------------------------------------------------------
@functools.partial(jax.jit, static_argnames=("pad_idx",))
def textcnn_forward(token_ids, emb_table, conv_params, fc_w, fc_b, *, pad_idx):
    B, L = token_ids.shape
    _, E = emb_table.shape
    C = conv_params[0][0].shape[-1]
    nC = len(FILTER_SIZES) * C
    assert L >= FS_MAX, "sequence shorter than the largest filter size"

    lout_pad = _round_up(L - min(FILTER_SIZES) + 1, 8)     # sublane-aligned positions
    L_src = lout_pad + FS_MAX - 1

    # Batch tile: ~2048 rows per grid step (multiple of 8).  Sized conservatively
    # so double-buffered inputs + f32 temporaries stay a few MiB — fits v7x's
    # 64 MiB VMEM as well as v5e/v6e; B > tb_cap automatically yields >= 2 grid
    # steps so both v7x TensorCores are fed.
    target_rows = 2048
    tb_cap = max(8, (target_rows // lout_pad) // 8 * 8)
    if B <= tb_cap:
        TB, B_pad = B, B                                   # single tile (small batch)
    else:
        TB = tb_cap
        B_pad = _round_up(B, TB)

    # --- glue: embedding gather (pad row already zeroed at parameter creation) ---
    ids = jnp.pad(token_ids, ((0, B_pad - B), (0, L_src - L)),
                  constant_values=pad_idx)                             # (B_pad, L_src)
    emb = jnp.take(emb_table, ids, axis=0).astype(jnp.bfloat16)        # (B_pad, L_src, E)

    # --- pack the 4 conv filters along output channels; fold BN scale & bias ---
    w_comb = jnp.zeros((FS_MAX, E, nC), jnp.float32)
    shift_parts = []
    for i, (fs, (w, bia, sc, sh)) in enumerate(zip(FILTER_SIZES, conv_params)):
        w_comb = w_comb.at[:fs, :, i * C:(i + 1) * C].set(w * sc)      # BN scale folded
        shift_parts.append(bia * sc + sh)                              # bias*scale + shift
    w_comb = w_comb.astype(jnp.bfloat16)
    shift = jnp.concatenate(shift_parts, axis=1).astype(jnp.float32)   # (1, 4C)
    vlen = jnp.repeat(jnp.array([L - fs + 1 for fs in FILTER_SIZES], jnp.int32),
                      C)[None, :]                                      # (1, 4C)

    full2 = lambda i: (0, 0)
    feat = pl.pallas_call(
        functools.partial(textcnn_kernel, lout_pad=lout_pad),
        out_shape=jax.ShapeDtypeStruct((B_pad, nC), jnp.float32),
        grid=(B_pad // TB,),
        in_specs=[
            pl.BlockSpec((TB, L_src, E), lambda i: (i, 0, 0)),   # embedding batch tile
            pl.BlockSpec((FS_MAX, E, nC), lambda i: (0, 0, 0)),  # packed weights (resident)
            pl.BlockSpec((1, nC), full2),
            pl.BlockSpec((1, nC), full2),
        ],
        out_specs=pl.BlockSpec((TB, nC), lambda i: (i, 0)),      # lane-dense output
        compiler_params=pltpu.CompilerParams(
            dimension_semantics=("parallel",),
            vmem_limit_bytes=48 * 1024 * 1024),
    )(emb, w_comb, shift, vlen)

    # dropout is identity at inference; tiny 4C -> 1 linear layer in the wrapper.
    return feat[:B] @ fc_w.astype(jnp.float32) + fc_b.astype(jnp.float32)


# ----------------------------------------------------------------------------
# Pure-JAX reference (mirrors the torch forward in eval mode).
# ----------------------------------------------------------------------------
def reference_forward(token_ids, emb_table, conv_params, fc_w, fc_b, pad_idx):
    emb = jnp.take(emb_table, token_ids, axis=0).astype(jnp.float32)   # (B, L, E)
    B, L, E = emb.shape
    feats = []
    for fs, (w, bia, sc, sh) in zip(FILTER_SIZES, conv_params):
        lout = L - fs + 1
        windows = jnp.stack([emb[:, j:j + lout, :] for j in range(fs)], axis=2)
        conv = jnp.einsum("blfe,fec->blc", windows, w)                 # (B, lout, C)
        y = jnp.maximum((conv + bia) * sc + sh, 0.0)
        feats.append(jnp.max(y, axis=1))                               # (B, C)
    feat = jnp.concatenate(feats, axis=1)                              # (B, 4C)
    return feat @ fc_w + fc_b


# ----------------------------------------------------------------------------
# Deterministic synthetic parameters (no checkpoint loading).
# ----------------------------------------------------------------------------
def make_params(key, vocab_size, embed_dim, pad_idx, out_channels=64):
    keys = jax.random.split(key, 32)
    k_iter = iter(keys)

    emb_table = jax.random.normal(next(k_iter), (vocab_size, embed_dim),
                                  jnp.float32)
    # nn.Embedding(padding_idx) keeps the pad row at zero; do it once here
    # (hoisted out of the jitted forward per the perf review).
    emb_table = emb_table.at[pad_idx].set(0.0)

    conv_params = []
    eps = 1e-5
    for fs in FILTER_SIZES:
        fan_in = fs * embed_dim
        bound = 1.0 / jnp.sqrt(fan_in)
        w = jax.random.uniform(next(k_iter), (fs, embed_dim, out_channels),
                               jnp.float32, -bound, bound)
        bia = jax.random.uniform(next(k_iter), (1, out_channels),
                                 jnp.float32, -bound, bound)
        gamma = jax.random.uniform(next(k_iter), (1, out_channels),
                                   jnp.float32, 0.5, 1.5)
        beta = 0.1 * jax.random.normal(next(k_iter), (1, out_channels),
                                       jnp.float32)
        run_mean = 0.1 * jax.random.normal(next(k_iter), (1, out_channels),
                                           jnp.float32)
        run_var = jax.random.uniform(next(k_iter), (1, out_channels),
                                     jnp.float32, 0.5, 1.5)
        scale = gamma / jnp.sqrt(run_var + eps)
        shift = beta - run_mean * scale
        conv_params.append((w, bia, scale, shift))

    fc_in = len(FILTER_SIZES) * out_channels
    fbound = 1.0 / jnp.sqrt(fc_in)
    fc_w = jax.random.uniform(next(k_iter), (fc_in, 1), jnp.float32,
                              -fbound, fbound)
    fc_b = jax.random.uniform(next(k_iter), (1, 1), jnp.float32,
                              -fbound, fbound)
    return emb_table, conv_params, fc_w, fc_b


if __name__ == "__main__":
    B, L = 2, 16                 # batch, sequence length
    VOCAB, EMBED = 50, 32        # vocab_size, embedding_dim
    PAD_IDX = VOCAB - 1

    key = jax.random.PRNGKey(0)
    k_par, k_tok = jax.random.split(key)

    emb_table, conv_params, fc_w, fc_b = make_params(k_par, VOCAB, EMBED,
                                                     PAD_IDX)
    token_ids = jax.random.randint(k_tok, (B, L), 0, VOCAB, dtype=jnp.int32)

    out = textcnn_forward(token_ids, emb_table, conv_params, fc_w, fc_b,
                          pad_idx=PAD_IDX)
    out = jax.block_until_ready(out)

    ref = reference_forward(token_ids, emb_table, conv_params, fc_w, fc_b,
                            PAD_IDX)
    ref = jax.block_until_ready(ref)

    assert out.shape == (B, 1), out.shape
    # bf16 MXU inputs (with BN scale folded into the weights) + f32 accumulation
    if not jnp.allclose(out, ref, rtol=2e-2, atol=2e-2):
        raise AssertionError(f"mismatch: pallas={out} ref={ref}")

    print("KERNEL_OK")
</pallas_src>

<mosaic_0001>
module attributes {stable_mosaic.version = 11 : i64} {
  func.func @textcnn_kernel(%arg0: i32, %arg1: memref<2x20x32xbf16, #tpu.memory_space<vmem>>, %arg2: memref<5x32x256xbf16, #tpu.memory_space<vmem>>, %arg3: memref<1x256xf32, #tpu.memory_space<vmem>>, %arg4: memref<1x256xi32, #tpu.memory_space<vmem>>, %arg5: memref<2x256xf32, #tpu.memory_space<vmem>>) attributes {dimension_semantics = [#tpu.dimension_semantics<parallel>], iteration_bounds = array<i64: 1>, scalar_prefetch = 0 : i64, scratch_operands = 0 : i64, tpu.core_type = #tpu.core_type<tc>, window_params = [{transform_indices = @transform_0, window_bounds = array<i64: 2, 20, 32>}, {pipeline_mode = #tpu.pipeline_mode<synchronous>, transform_indices = @transform_1, window_bounds = array<i64: 5, 32, 256>}, {pipeline_mode = #tpu.pipeline_mode<synchronous>, transform_indices = @transform_2, window_bounds = array<i64: 1, 256>}, {pipeline_mode = #tpu.pipeline_mode<synchronous>, transform_indices = @transform_3, window_bounds = array<i64: 1, 256>}, {transform_indices = @transform_4, window_bounds = array<i64: 2, 256>}]} {
    %cst = arith.constant 0.000000e+00 : f32
    %0 = vector.broadcast %cst : f32 to vector<32x256xf32>
    %c0 = arith.constant 0 : index
    %c0_0 = arith.constant 0 : index
    %c0_1 = arith.constant 0 : index
    %1 = vector.load %arg1[%c0, %c0_0, %c0_1] : memref<2x20x32xbf16, #tpu.memory_space<vmem>>, vector<2x16x32xbf16>
    %2 = vector.shape_cast %1 : vector<2x16x32xbf16> to vector<32x32xbf16>
    %c0_2 = arith.constant 0 : index
    %c0_3 = arith.constant 0 : index
    %c0_4 = arith.constant 0 : index
    %3 = vector.load %arg2[%c0_2, %c0_3, %c0_4] : memref<5x32x256xbf16, #tpu.memory_space<vmem>>, vector<1x32x256xbf16>
    %4 = vector.shape_cast %3 : vector<1x32x256xbf16> to vector<32x256xbf16>
    %cst_5 = arith.constant dense<0.000000e+00> : vector<32x256xf32>
    %5 = tpu.matmul %2, %4, %cst_5 {dimension_numbers = #tpu.dot_dimension_numbers<[1], [0], [0], [1], [0, 0, 1, 1], [], []>} : vector<32x32xbf16>, vector<32x256xbf16>, vector<32x256xf32> -> vector<32x256xf32>
    %6 = arith.addf %0, %5 : vector<32x256xf32>
    %c0_6 = arith.constant 0 : index
    %c1 = arith.constant 1 : index
    %c0_7 = arith.constant 0 : index
    %7 = vector.load %arg1[%c0_6, %c1, %c0_7] : memref<2x20x32xbf16, #tpu.memory_space<vmem>>, vector<2x16x32xbf16>
    %8 = vector.shape_cast %7 : vector<2x16x32xbf16> to vector<32x32xbf16>
    %c1_8 = arith.constant 1 : index
    %c0_9 = arith.constant 0 : index
    %c0_10 = arith.constant 0 : index
    %9 = vector.load %arg2[%c1_8, %c0_9, %c0_10] : memref<5x32x256xbf16, #tpu.memory_space<vmem>>, vector<1x32x256xbf16>
    %10 = vector.shape_cast %9 : vector<1x32x256xbf16> to vector<32x256xbf16>
    %cst_11 = arith.constant dense<0.000000e+00> : vector<32x256xf32>
    %11 = tpu.matmul %8, %10, %cst_11 {dimension_numbers = #tpu.dot_dimension_numbers<[1], [0], [0], [1], [0, 0, 1, 1], [], []>} : vector<32x32xbf16>, vector<32x256xbf16>, vector<32x256xf32> -> vector<32x256xf32>
    %12 = arith.addf %6, %11 : vector<32x256xf32>
    %c0_12 = arith.constant 0 : index
    %c2 = arith.constant 2 : index
    %c0_13 = arith.constant 0 : index
    %13 = vector.load %arg1[%c0_12, %c2, %c0_13] : memref<2x20x32xbf16, #tpu.memory_space<vmem>>, vector<2x16x32xbf16>
    %14 = vector.shape_cast %13 : vector<2x16x32xbf16> to vector<32x32xbf16>
    %c2_14 = arith.constant 2 : index
    %c0_15 = arith.constant 0 : index
    %c0_16 = arith.constant 0 : index
    %15 = vector.load %arg2[%c2_14, %c0_15, %c0_16] : memref<5x32x256xbf16, #tpu.memory_space<vmem>>, vector<1x32x256xbf16>
    %16 = vector.shape_cast %15 : vector<1x32x256xbf16> to vector<32x256xbf16>
    %cst_17 = arith.constant dense<0.000000e+00> : vector<32x256xf32>
    %17 = tpu.matmul %14, %16, %cst_17 {dimension_numbers = #tpu.dot_dimension_numbers<[1], [0], [0], [1], [0, 0, 1, 1], [], []>} : vector<32x32xbf16>, vector<32x256xbf16>, vector<32x256xf32> -> vector<32x256xf32>
    %18 = arith.addf %12, %17 : vector<32x256xf32>
    %c0_18 = arith.constant 0 : index
    %c3 = arith.constant 3 : index
    %c0_19 = arith.constant 0 : index
    %19 = vector.load %arg1[%c0_18, %c3, %c0_19] : memref<2x20x32xbf16, #tpu.memory_space<vmem>>, vector<2x16x32xbf16>
    %20 = vector.shape_cast %19 : vector<2x16x32xbf16> to vector<32x32xbf16>
    %c3_20 = arith.constant 3 : index
    %c0_21 = arith.constant 0 : index
    %c0_22 = arith.constant 0 : index
    %21 = vector.load %arg2[%c3_20, %c0_21, %c0_22] : memref<5x32x256xbf16, #tpu.memory_space<vmem>>, vector<1x32x256xbf16>
    %22 = vector.shape_cast %21 : vector<1x32x256xbf16> to vector<32x256xbf16>
    %cst_23 = arith.constant dense<0.000000e+00> : vector<32x256xf32>
    %23 = tpu.matmul %20, %22, %cst_23 {dimension_numbers = #tpu.dot_dimension_numbers<[1], [0], [0], [1], [0, 0, 1, 1], [], []>} : vector<32x32xbf16>, vector<32x256xbf16>, vector<32x256xf32> -> vector<32x256xf32>
    %24 = arith.addf %18, %23 : vector<32x256xf32>
    %c0_24 = arith.constant 0 : index
    %c4 = arith.constant 4 : index
    %c0_25 = arith.constant 0 : index
    %25 = vector.load %arg1[%c0_24, %c4, %c0_25] : memref<2x20x32xbf16, #tpu.memory_space<vmem>>, vector<2x16x32xbf16>
    %26 = vector.shape_cast %25 : vector<2x16x32xbf16> to vector<32x32xbf16>
    %c4_26 = arith.constant 4 : index
    %c0_27 = arith.constant 0 : index
    %c0_28 = arith.constant 0 : index
    %27 = vector.load %arg2[%c4_26, %c0_27, %c0_28] : memref<5x32x256xbf16, #tpu.memory_space<vmem>>, vector<1x32x256xbf16>
    %28 = vector.shape_cast %27 : vector<1x32x256xbf16> to vector<32x256xbf16>
    %cst_29 = arith.constant dense<0.000000e+00> : vector<32x256xf32>
    %29 = tpu.matmul %26, %28, %cst_29 {dimension_numbers = #tpu.dot_dimension_numbers<[1], [0], [0], [1], [0, 0, 1, 1], [], []>} : vector<32x32xbf16>, vector<32x256xbf16>, vector<32x256xf32> -> vector<32x256xf32>
    %30 = arith.addf %24, %29 : vector<32x256xf32>
    %c0_30 = arith.constant 0 : index
    %c0_31 = arith.constant 0 : index
    %31 = vector.load %arg3[%c0_30, %c0_31] : memref<1x256xf32, #tpu.memory_space<vmem>>, vector<1x256xf32>
    %32 = vector.broadcast %31 : vector<1x256xf32> to vector<32x256xf32>
    %33 = arith.addf %30, %32 : vector<32x256xf32>
    %cst_32 = arith.constant 0.000000e+00 : f32
    %34 = vector.broadcast %cst_32 : f32 to vector<32x256xf32>
    %35 = arith.maximumf %33, %34 : vector<32x256xf32>
    %36 = tpu.iota {dimensions = array<i32: 0>} : vector<16x256xi32>
    %c0_33 = arith.constant 0 : index
    %c0_34 = arith.constant 0 : index
    %37 = vector.load %arg4[%c0_33, %c0_34] : memref<1x256xi32, #tpu.memory_space<vmem>>, vector<1x256xi32>
    %38 = vector.broadcast %37 : vector<1x256xi32> to vector<16x256xi32>
    %39 = arith.cmpi slt, %36, %38 : vector<16x256xi32>
    %40 = vector.shape_cast %39 : vector<16x256xi1> to vector<1x16x256xi1>
    %41 = vector.shape_cast %35 : vector<32x256xf32> to vector<2x16x256xf32>
    %cst_35 = arith.constant 0.000000e+00 : f32
    %42 = vector.shape_cast %40 : vector<1x16x256xi1> to vector<1x16x256xi1>
    %43 = vector.broadcast %42 : vector<1x16x256xi1> to vector<2x16x256xi1>
    %44 = vector.broadcast %cst_35 : f32 to vector<2x16x256xf32>
    %45 = arith.select %43, %41, %44 : vector<2x16x256xi1>, vector<2x16x256xf32>
    %cst_36 = arith.constant dense<0xFF800000> : vector<2x256xf32>
    %46 = vector.multi_reduction <maximumf>, %45, %cst_36 [1] : vector<2x16x256xf32> to vector<2x256xf32>
    %c0_37 = arith.constant 0 : index
    %c0_38 = arith.constant 0 : index
    %47 = vector.load %arg5[%c0_37, %c0_38] : memref<2x256xf32, #tpu.memory_space<vmem>>, vector<2x256xf32>
    tpu.vector_store %arg5[%c0_37, %c0_38], %46 {strides = array<i32>} : memref<2x256xf32, #tpu.memory_space<vmem>>, vector<2x256xf32>,
    return
  }
  func.func @transform_0(%arg0: i32) -> (i32, i32, i32) {
    %c0_i32 = arith.constant 0 : i32
    %c0_i32_0 = arith.constant 0 : i32
    %c0_i32_1 = arith.constant 0 : i32
    return %arg0, %c0_i32, %c0_i32_0 : i32, i32, i32
  }
  func.func @transform_1(%arg0: i32) -> (i32, i32, i32) {
    %c0_i32 = arith.constant 0 : i32
    %c0_i32_0 = arith.constant 0 : i32
    %c0_i32_1 = arith.constant 0 : i32
    %c0_i32_2 = arith.constant 0 : i32
    return %c0_i32, %c0_i32_0, %c0_i32_1 : i32, i32, i32
  }
  func.func @transform_2(%arg0: i32) -> (i32, i32) {
    %c0_i32 = arith.constant 0 : i32
    %c0_i32_0 = arith.constant 0 : i32
    %c0_i32_1 = arith.constant 0 : i32
    return %c0_i32, %c0_i32_0 : i32, i32
  }
  func.func @transform_3(%arg0: i32) -> (i32, i32) {
    %c0_i32 = arith.constant 0 : i32
    %c0_i32_0 = arith.constant 0 : i32
    %c0_i32_1 = arith.constant 0 : i32
    return %c0_i32, %c0_i32_0 : i32, i32
  }
  func.func @transform_4(%arg0: i32) -> (i32, i32) {
    %c0_i32 = arith.constant 0 : i32
    %c0_i32_0 = arith.constant 0 : i32
    return %arg0, %c0_i32 : i32, i32
  }
}

</mosaic_0001>

<llo_original>
// kernel: textcnn_forward.1
$region0: #{textcnn_forward.1}
  #allocation0 [shape = 'u32[]', space=smem, size = 0x4, offset = 0x4, fixed_abs, tag = 'smem constant byte address 0x4 - core index']
  #allocation1 [shape = 'u32[72,128]{1,0:T(1,128)}', space=vmem, size = 0x9000, scoped, tag = 'internal scratch']
  %s0 = inlined_call_operand.vmem [shape: bf16[2,20,32], index: 0, kind: input, shape index: {}]
  %s1 = inlined_call_operand.vmem [shape: bf16[5,32,256], index: 1, kind: input, shape index: {}]
  %s2 = inlined_call_operand.vmem [shape: f32[1,256], index: 2, kind: input, shape index: {}]
  %s3 = inlined_call_operand.vmem [shape: s32[1,256], index: 3, kind: input, shape index: {}]
  %s4 = inlined_call_operand.vmem [shape: f32[2,256], index: 4, kind: output, shape index: {}]
  %s5 = sld [smem:[#allocation0]]
  $region26: #{textcnn_forward.1} parent=0
    _
  %s7 = ssub.s32 1, %s5
  %s8 = scalar_select 0, %s7, %s5
  // Predicated region
  $region2: #{textcnn_forward.1} parent=0 // pred_check
    _
  $region3: #{textcnn_forward.1} parent=0 // pred_check_branch
    %10 = sbr.rel (0) target = $region5
  $region4: #{textcnn_forward.1} parent=0 // pred_region
    _
  $region5: #{textcnn_forward.1} parent=0 // pred_fallthru
    _
  // Predicated region
  $region6: #{textcnn_forward.1} parent=0 // pred_check
    _
  $region7: #{textcnn_forward.1} parent=0 // pred_check_branch
    %12 = sbr.rel (0) target = $region9
  $region8: #{textcnn_forward.1} parent=0 // pred_region
    _
  $region9: #{textcnn_forward.1} parent=0 // pred_fallthru
    _
  // Predicated region
  $region10: #{textcnn_forward.1} parent=0 // pred_check
    _
  $region11: #{textcnn_forward.1} parent=0 // pred_check_branch
    %14 = sbr.rel (0) target = $region13
  $region12: #{textcnn_forward.1} parent=0 // pred_region
    _
  $region13: #{textcnn_forward.1} parent=0 // pred_fallthru
    _
  // Predicated region
  $region14: #{textcnn_forward.1} parent=0 // pred_check
    _
  $region15: #{textcnn_forward.1} parent=0 // pred_check_branch
    %16 = sbr.rel (0) target = $region17
  $region16: #{textcnn_forward.1} parent=0 // pred_region
    _
  $region17: #{textcnn_forward.1} parent=0 // pred_fallthru
    _
  %v18 = vld [vmem:[%s0] sm:$0xf]
  %v19 = vld [vmem:[%s0 + $0x4] sm:$0xf]
  %v20 = vld [vmem:[%s0 + $0xc] sm:$0xf]
  %v21 = vld [vmem:[%s0 + $0x10] sm:$0xf]
  %v22 = vld [vmem:[%s1] sm:$0xff]
  %v23 = vld [vmem:[%s1 + $0x8] sm:$0xff]
  %v24 = vld [vmem:[%s1 + $0x10] sm:$0xff]
  %v25 = vld [vmem:[%s1 + $0x18] sm:$0xff]
  %v26 = vld [vmem:[%s0 + $0x8] sm:$0x1]
  %v27 = vld [vmem:[%s0 + $0x14] sm:$0x1]
  %vm28 = vsmask.f32 3328
  %vm29 = vsmask.f32 7440
  %vm30 = vmor %vm28, %vm29
  %v32 = vshrl.u32 %v18, 16
  %v34 = vrot.slane %v32, 4
  %v35 = vshll.u32 %v18, 16
  %v37 = vrot.slane %v35, 5
  %v38 = vor.u32 %v34, %v37
  %v39 = vrot.slane %v38, 4
  %v41 = vshll.u32 %v19, 16
  %v43 = vrot.slane %v41, 5
  %v44 = vsel %vm30, %v39, %v43
  %v45 = vshrl.u32 %v19, 16
  %v47 = vrot.slane %v45, 4
  %v48 = vor.u32 %v47, %v43
  %v49 = vrot.slane %v48, 4
  %v51 = vshll.u32 %v26, 16
  %v53 = vrot.slane %v51, 5
  %v54 = vsel %vm30, %v49, %v53
  %v56 = vshrl.u32 %v20, 16
  %v58 = vrot.slane %v56, 4
  %v59 = vshll.u32 %v20, 16
  %v61 = vrot.slane %v59, 5
  %v62 = vor.u32 %v58, %v61
  %v63 = vrot.slane %v62, 4
  %v65 = vshll.u32 %v21, 16
  %v67 = vrot.slane %v65, 5
  %v68 = vsel %vm30, %v63, %v67
  %v69 = vshrl.u32 %v21, 16
  %v71 = vrot.slane %v69, 4
  %v72 = vor.u32 %v71, %v67
  %v73 = vrot.slane %v72, 4
  %v75 = vshll.u32 %v27, 16
  %v77 = vrot.slane %v75, 5
  %v78 = vsel %vm30, %v73, %v77
  %s79 = scalar_lea.vmem %s1, 32
  %v80 = vld [vmem:[%s79] sm:$0xff]
  %v81 = vld [vmem:[%s79 + $0x8] sm:$0xff]
  %v82 = vld [vmem:[%s79 + $0x10] sm:$0xff]
  %v83 = vld [vmem:[%s79 + $0x18] sm:$0xff]
  %v84 = vunpack.c.l.b16 %v44
  %v85 = vunpack.c.l.b16 %v54
  %v86 = vunpack.c.l.b16 %v68
  %v87 = vunpack.c.l.b16 %v78
  %v88 = vpack.c.b16 %v85, %v84
  %v89 = vpack.c.b16 %v87, %v86
  %v94 = vunpack.c.l.b16 %v80
  %v95 = vunpack.c.h.b16 %v80
  %v96 = vunpack.c.l.b16 %v81
  %v97 = vunpack.c.h.b16 %v81
  %v98 = vunpack.c.l.b16 %v82
  %v99 = vunpack.c.h.b16 %v82
  %v100 = vunpack.c.l.b16 %v83
  %v101 = vunpack.c.h.b16 %v83
  %v102 = vpack.c.b16 %v96, %v94
  %v103 = vpack.c.b16 %v97, %v95
  %v104 = vpack.c.b16 %v100, %v98
  %v105 = vpack.c.b16 %v101, %v99
  %vm110 = vcmask 261120
  %v112 = vsel %vm110, %v88, 0
  %v115 = vsel %vm110, %v89, 0
  %117 = vmatpush.bf16.msra.mxu0 0
  %118 = vmatpush.bf16.msra.mxu0 0
  %119 = vmatpush.bf16.msra.mxu0 0
  %120 = vmatpush.bf16.msra.mxu0 0
  %121 = vmatpush.bf16.msra.mxu0 0
  %122 = vmatpush.bf16.msra.mxu0 0
  %123 = vmatpush.bf16.msra.mxu0 %v104
  %124 = vmatpush.bf16.msra.mxu0 %v102
  %125 = vmatmul.bf16.gmra.mxu0 %v112
  %v126 = vpop.f32.mrf.mxu0
  %v127 = vadd.f32 0.0, %v126
  %v128 = vpop.f32.mrf.mxu0
  %v129 = vadd.f32 0.0, %v128
  %130 = vmatmul.bf16.gmra.mxu0 %v115
  %v131 = vpop.f32.mrf.mxu0
  %v132 = vadd.f32 0.0, %v131
  %v133 = vpop.f32.mrf.mxu0
  %v134 = vadd.f32 0.0, %v133
  %135 = vdwg.mxu0
  %136 = vmatpush.bf16.msra.mxu0 0
  %137 = vmatpush.bf16.msra.mxu0 0
  %138 = vmatpush.bf16.msra.mxu0 0
  %139 = vmatpush.bf16.msra.mxu0 0
  %140 = vmatpush.bf16.msra.mxu0 0
  %141 = vmatpush.bf16.msra.mxu0 0
  %142 = vmatpush.bf16.msra.mxu0 %v105
  %143 = vmatpush.bf16.msra.mxu0 %v103
  %144 = vmatmul.bf16.gmra.mxu0 %v112
  %v145 = vpop.f32.mrf.mxu0
  %v146 = vadd.f32 0.0, %v145
  %v147 = vpop.f32.mrf.mxu0
  %v148 = vadd.f32 0.0, %v147
  %149 = vmatmul.bf16.gmra.mxu0 %v115
  %v150 = vpop.f32.mrf.mxu0
  %v151 = vadd.f32 0.0, %v150
  %v152 = vpop.f32.mrf.mxu0
  %v153 = vadd.f32 0.0, %v152
  %154 = vdwg.mxu0
  %v159 = vunpack.c.l.b16 %v18
  %v160 = vunpack.c.l.b16 %v19
  %v161 = vunpack.c.l.b16 %v20
  %v162 = vunpack.c.l.b16 %v21
  %v163 = vpack.c.b16 %v160, %v159
  %v164 = vpack.c.b16 %v162, %v161
  %v169 = vunpack.c.l.b16 %v22
  %v170 = vunpack.c.h.b16 %v22
  %v171 = vunpack.c.l.b16 %v23
  %v172 = vunpack.c.h.b16 %v23
  %v173 = vunpack.c.l.b16 %v24
  %v174 = vunpack.c.h.b16 %v24
  %v175 = vunpack.c.l.b16 %v25
  %v176 = vunpack.c.h.b16 %v25
  %v177 = vpack.c.b16 %v171, %v169
  %v178 = vpack.c.b16 %v172, %v170
  %v179 = vpack.c.b16 %v175, %v173
  %v180 = vpack.c.b16 %v176, %v174
  %v186 = vsel %vm110, %v163, 0
  %v189 = vsel %vm110, %v164, 0
  %191 = vmatpush.bf16.msra.mxu0 0
  %192 = vmatpush.bf16.msra.mxu0 0
  %193 = vmatpush.bf16.msra.mxu0 0
  %194 = vmatpush.bf16.msra.mxu0 0
  %195 = vmatpush.bf16.msra.mxu0 0
  %196 = vmatpush.bf16.msra.mxu0 0
  %197 = vmatpush.bf16.msra.mxu0 %v179
  %198 = vmatpush.bf16.msra.mxu0 %v177
  %199 = vmatmul.bf16.gmra.mxu0 %v186
  %v200 = vpop.f32.mrf.mxu0
  %v201 = vadd.f32 %v127, %v200
  %v202 = vpop.f32.mrf.mxu0
  %v203 = vadd.f32 %v129, %v202
  %204 = vmatmul.bf16.gmra.mxu0 %v189
  %v205 = vpop.f32.mrf.mxu0
  %v206 = vadd.f32 %v132, %v205
  %v207 = vpop.f32.mrf.mxu0
  %v208 = vadd.f32 %v134, %v207
  %209 = vdwg.mxu0
  %210 = vmatpush.bf16.msra.mxu0 0
  %211 = vmatpush.bf16.msra.mxu0 0
  %212 = vmatpush.bf16.msra.mxu0 0
  %213 = vmatpush.bf16.msra.mxu0 0
  %214 = vmatpush.bf16.msra.mxu0 0
  %215 = vmatpush.bf16.msra.mxu0 0
  %216 = vmatpush.bf16.msra.mxu0 %v180
  %217 = vmatpush.bf16.msra.mxu0 %v178
  %218 = vmatmul.bf16.gmra.mxu0 %v186
  %v219 = vpop.f32.mrf.mxu0
  %v220 = vadd.f32 %v146, %v219
  %v221 = vpop.f32.mrf.mxu0
  %v222 = vadd.f32 %v148, %v221
  %223 = vmatmul.bf16.gmra.mxu0 %v189
  %v224 = vpop.f32.mrf.mxu0
  %v225 = vadd.f32 %v151, %v224
  %v226 = vpop.f32.mrf.mxu0
  %v227 = vadd.f32 %v153, %v226
  %228 = vdwg.mxu0
  %v229 = vld [vmem:[%s0] sm:$0xe]
  %v230 = vld [vmem:[%s0 + $0xc] sm:$0xe]
  %vm235 = vcmask 1042432
  %vm236 = vcmask 1046532
  %vm237 = vmor %vm235, %vm236
  %v238 = vrot.slane %v229, 5
  %v239 = vrot.slane %v238, 4
  %v240 = vrot.slane %v19, 5
  %v241 = vsel %vm237, %v239, %v240
  %v242 = vrot.slane %v240, 4
  %v243 = vrot.slane %v26, 5
  %v244 = vsel %vm237, %v242, %v243
  %v245 = vrot.slane %v230, 5
  %v246 = vrot.slane %v245, 4
  %v247 = vrot.slane %v21, 5
  %v248 = vsel %vm237, %v246, %v247
  %v249 = vrot.slane %v247, 4
  %v250 = vrot.slane %v27, 5
  %v251 = vsel %vm237, %v249, %v250
  %s252 = scalar_lea.vmem %s1, 64
  %v253 = vld [vmem:[%s252] sm:$0xff]
  %v254 = vld [vmem:[%s252 + $0x8] sm:$0xff]
  %v255 = vld [vmem:[%s252 + $0x10] sm:$0xff]
  %v256 = vld [vmem:[%s252 + $0x18] sm:$0xff]
  %v257 = vunpack.c.l.b16 %v241
  %v258 = vunpack.c.l.b16 %v244
  %v259 = vunpack.c.l.b16 %v248
  %v260 = vunpack.c.l.b16 %v251
  %v261 = vpack.c.b16 %v258, %v257
  %v262 = vpack.c.b16 %v260, %v259
  %v267 = vunpack.c.l.b16 %v253
  %v268 = vunpack.c.h.b16 %v253
  %v269 = vunpack.c.l.b16 %v254
  %v270 = vunpack.c.h.b16 %v254
  %v271 = vunpack.c.l.b16 %v255
  %v272 = vunpack.c.h.b16 %v255
  %v273 = vunpack.c.l.b16 %v256
  %v274 = vunpack.c.h.b16 %v256
  %v275 = vpack.c.b16 %v269, %v267
  %v276 = vpack.c.b16 %v270, %v268
  %v277 = vpack.c.b16 %v273, %v271
  %v278 = vpack.c.b16 %v274, %v272
  %v284 = vsel %vm110, %v261, 0
  %v287 = vsel %vm110, %v262, 0
  %289 = vmatpush.bf16.msra.mxu0 0
  %290 = vmatpush.bf16.msra.mxu0 0
  %291 = vmatpush.bf16.msra.mxu0 0
  %292 = vmatpush.bf16.msra.mxu0 0
  %293 = vmatpush.bf16.msra.mxu0 0
  %294 = vmatpush.bf16.msra.mxu0 0
  %295 = vmatpush.bf16.msra.mxu0 %v277
  %296 = vmatpush.bf16.msra.mxu0 %v275
  %297 = vmatmul.bf16.gmra.mxu0 %v284
  %v298 = vpop.f32.mrf.mxu0
  %v299 = vadd.f32 0.0, %v298
  %v300 = vpop.f32.mrf.mxu0
  %v301 = vadd.f32 0.0, %v300
  %302 = vmatmul.bf16.gmra.mxu0 %v287
  %v303 = vpop.f32.mrf.mxu0
  %v304 = vadd.f32 0.0, %v303
  %v305 = vpop.f32.mrf.mxu0
  %v306 = vadd.f32 0.0, %v305
  %307 = vdwg.mxu0
  %308 = vmatpush.bf16.msra.mxu0 0
  %309 = vmatpush.bf16.msra.mxu0 0
  %310 = vmatpush.bf16.msra.mxu0 0
  %311 = vmatpush.bf16.msra.mxu0 0
  %312 = vmatpush.bf16.msra.mxu0 0
  %313 = vmatpush.bf16.msra.mxu0 0
  %314 = vmatpush.bf16.msra.mxu0 %v278
  %315 = vmatpush.bf16.msra.mxu0 %v276
  %316 = vmatmul.bf16.gmra.mxu0 %v284
  %v317 = vpop.f32.mrf.mxu0
  %v318 = vadd.f32 0.0, %v317
  %v319 = vpop.f32.mrf.mxu0
  %v320 = vadd.f32 0.0, %v319
  %321 = vmatmul.bf16.gmra.mxu0 %v287
  %v322 = vpop.f32.mrf.mxu0
  %v323 = vadd.f32 0.0, %v322
  %v324 = vpop.f32.mrf.mxu0
  %v325 = vadd.f32 0.0, %v324
  %326 = vdwg.mxu0
  %v327 = vadd.f32 %v201, %v299
  %v328 = vadd.f32 %v220, %v318
  %v329 = vadd.f32 %v203, %v301
  %v330 = vadd.f32 %v222, %v320
  %v331 = vadd.f32 %v206, %v304
  %v332 = vadd.f32 %v225, %v323
  %v333 = vadd.f32 %v208, %v306
  %v334 = vadd.f32 %v227, %v325
  %v335 = vld [vmem:[%s0 + $0x8] sm:$0x3]
  %v336 = vld [vmem:[%s0 + $0x14] sm:$0x3]
  %vm337 = vsmask.f32 2304
  %vm338 = vsmask.f32 6416
  %vm339 = vmor %vm337, %vm338
  %v341 = vshrl.u32 %v229, 16
  %v343 = vrot.slane %v341, 5
  %v344 = vshll.u32 %v229, 16
  %v346 = vrot.slane %v344, 6
  %v347 = vor.u32 %v343, %v346
  %v348 = vrot.slane %v347, 4
  %v349 = vrot.slane %v45, 5
  %v350 = vrot.slane %v41, 6
  %v351 = vor.u32 %v349, %v350
  %v352 = vsel %vm339, %v348, %v351
  %v353 = vrot.slane %v351, 4
  %v355 = vshrl.u32 %v335, 16
  %v357 = vrot.slane %v355, 5
  %v358 = vshll.u32 %v335, 16
  %v360 = vrot.slane %v358, 6
  %v361 = vor.u32 %v357, %v360
  %v362 = vsel %vm339, %v353, %v361
  %v364 = vshrl.u32 %v230, 16
  %v366 = vrot.slane %v364, 5
  %v367 = vshll.u32 %v230, 16
  %v369 = vrot.slane %v367, 6
  %v370 = vor.u32 %v366, %v369
  %v371 = vrot.slane %v370, 4
  %v372 = vrot.slane %v69, 5
  %v373 = vrot.slane %v65, 6
  %v374 = vor.u32 %v372, %v373
  %v375 = vsel %vm339, %v371, %v374
  %v376 = vrot.slane %v374, 4
  %v378 = vshrl.u32 %v336, 16
  %v380 = vrot.slane %v378, 5
  %v381 = vshll.u32 %v336, 16
  %v383 = vrot.slane %v381, 6
  %v384 = vor.u32 %v380, %v383
  %v385 = vsel %vm339, %v376, %v384
  %s386 = scalar_lea.vmem %s1, 96
  %v387 = vld [vmem:[%s386] sm:$0xff]
  %v388 = vld [vmem:[%s386 + $0x8] sm:$0xff]
  %v389 = vld [vmem:[%s386 + $0x10] sm:$0xff]
  %v390 = vld [vmem:[%s386 + $0x18] sm:$0xff]
  %v391 = vunpack.c.l.b16 %v352
  %v392 = vunpack.c.l.b16 %v362
  %v393 = vunpack.c.l.b16 %v375
  %v394 = vunpack.c.l.b16 %v385
  %v395 = vpack.c.b16 %v392, %v391
  %v396 = vpack.c.b16 %v394, %v393
  %v401 = vunpack.c.l.b16 %v387
  %v402 = vunpack.c.h.b16 %v387
  %v403 = vunpack.c.l.b16 %v388
  %v404 = vunpack.c.h.b16 %v388
  %v405 = vunpack.c.l.b16 %v389
  %v406 = vunpack.c.h.b16 %v389
  %v407 = vunpack.c.l.b16 %v390
  %v408 = vunpack.c.h.b16 %v390
  %v409 = vpack.c.b16 %v403, %v401
  %v410 = vpack.c.b16 %v404, %v402
  %v411 = vpack.c.b16 %v407, %v405
  %v412 = vpack.c.b16 %v408, %v406
  %v418 = vsel %vm110, %v395, 0
  %v421 = vsel %vm110, %v396, 0
  %423 = vmatpush.bf16.msra.mxu0 0
  %424 = vmatpush.bf16.msra.mxu0 0
  %425 = vmatpush.bf16.msra.mxu0 0
  %426 = vmatpush.bf16.msra.mxu0 0
  %427 = vmatpush.bf16.msra.mxu0 0
  %428 = vmatpush.bf16.msra.mxu0 0
  %429 = vmatpush.bf16.msra.mxu0 %v411
  %430 = vmatpush.bf16.msra.mxu0 %v409
  %431 = vmatmul.bf16.gmra.mxu0 %v418
  %v432 = vpop.f32.mrf.mxu0
  %v433 = vadd.f32 0.0, %v432
  %v434 = vpop.f32.mrf.mxu0
  %v435 = vadd.f32 0.0, %v434
  %436 = vmatmul.bf16.gmra.mxu0 %v421
  %v437 = vpop.f32.mrf.mxu0
  %v438 = vadd.f32 0.0, %v437
  %v439 = vpop.f32.mrf.mxu0
  %v440 = vadd.f32 0.0, %v439
  %441 = vdwg.mxu0
  %442 = vmatpush.bf16.msra.mxu0 0
  %443 = vmatpush.bf16.msra.mxu0 0
  %444 = vmatpush.bf16.msra.mxu0 0
  %445 = vmatpush.bf16.msra.mxu0 0
  %446 = vmatpush.bf16.msra.mxu0 0
  %447 = vmatpush.bf16.msra.mxu0 0
  %448 = vmatpush.bf16.msra.mxu0 %v412
  %449 = vmatpush.bf16.msra.mxu0 %v410
  %450 = vmatmul.bf16.gmra.mxu0 %v418
  %v451 = vpop.f32.mrf.mxu0
  %v452 = vadd.f32 0.0, %v451
  %v453 = vpop.f32.mrf.mxu0
  %v454 = vadd.f32 0.0, %v453
  %455 = vmatmul.bf16.gmra.mxu0 %v421
  %v456 = vpop.f32.mrf.mxu0
  %v457 = vadd.f32 0.0, %v456
  %v458 = vpop.f32.mrf.mxu0
  %v459 = vadd.f32 0.0, %v458
  %460 = vdwg.mxu0
  %v461 = vadd.f32 %v327, %v433
  %v462 = vadd.f32 %v328, %v452
  %v463 = vadd.f32 %v329, %v435
  %v464 = vadd.f32 %v330, %v454
  %v465 = vadd.f32 %v331, %v438
  %v466 = vadd.f32 %v332, %v457
  %v467 = vadd.f32 %v333, %v440
  %v468 = vadd.f32 %v334, %v459
  %v469 = vld [vmem:[%s0] sm:$0xc]
  %v470 = vld [vmem:[%s0 + $0xc] sm:$0xc]
  %vm475 = vcmask 1041408
  %vm476 = vcmask 1045508
  %vm477 = vmor %vm475, %vm476
  %v478 = vrot.slane %v469, 6
  %v479 = vrot.slane %v478, 4
  %v480 = vrot.slane %v19, 6
  %v481 = vsel %vm477, %v479, %v480
  %v482 = vrot.slane %v480, 4
  %v483 = vrot.slane %v335, 6
  %v484 = vsel %vm477, %v482, %v483
  %v485 = vrot.slane %v470, 6
  %v486 = vrot.slane %v485, 4
  %v487 = vrot.slane %v21, 6
  %v488 = vsel %vm477, %v486, %v487
  %v489 = vrot.slane %v487, 4
  %v490 = vrot.slane %v336, 6
  %v491 = vsel %vm477, %v489, %v490
  %s492 = scalar_lea.vmem %s1, 128
  %v493 = vld [vmem:[%s492] sm:$0xff]
  %v494 = vld [vmem:[%s492 + $0x8] sm:$0xff]
  %v495 = vld [vmem:[%s492 + $0x10] sm:$0xff]
  %v496 = vld [vmem:[%s492 + $0x18] sm:$0xff]
  %v497 = vunpack.c.l.b16 %v481
  %v498 = vunpack.c.l.b16 %v484
  %v499 = vunpack.c.l.b16 %v488
  %v500 = vunpack.c.l.b16 %v491
  %v501 = vpack.c.b16 %v498, %v497
  %v502 = vpack.c.b16 %v500, %v499
  %v507 = vunpack.c.l.b16 %v493
  %v508 = vunpack.c.h.b16 %v493
  %v509 = vunpack.c.l.b16 %v494
  %v510 = vunpack.c.h.b16 %v494
  %v511 = vunpack.c.l.b16 %v495
  %v512 = vunpack.c.h.b16 %v495
  %v513 = vunpack.c.l.b16 %v496
  %v514 = vunpack.c.h.b16 %v496
  %v515 = vpack.c.b16 %v509, %v507
  %v516 = vpack.c.b16 %v510, %v508
  %v517 = vpack.c.b16 %v513, %v511
  %v518 = vpack.c.b16 %v514, %v512
  %v524 = vsel %vm110, %v501, 0
  %v527 = vsel %vm110, %v502, 0
  %529 = vmatpush.bf16.msra.mxu0 0
  %530 = vmatpush.bf16.msra.mxu0 0
  %531 = vmatpush.bf16.msra.mxu0 0
  %532 = vmatpush.bf16.msra.mxu0 0
  %533 = vmatpush.bf16.msra.mxu0 0
  %534 = vmatpush.bf16.msra.mxu0 0
  %535 = vmatpush.bf16.msra.mxu0 %v517
  %536 = vmatpush.bf16.msra.mxu0 %v515
  %537 = vmatmul.bf16.gmra.mxu0 %v524
  %v538 = vpop.f32.mrf.mxu0
  %v539 = vadd.f32 0.0, %v538
  %v540 = vpop.f32.mrf.mxu0
  %v541 = vadd.f32 0.0, %v540
  %542 = vmatmul.bf16.gmra.mxu0 %v527
  %v543 = vpop.f32.mrf.mxu0
  %v544 = vadd.f32 0.0, %v543
  %v545 = vpop.f32.mrf.mxu0
  %v546 = vadd.f32 0.0, %v545
  %547 = vdwg.mxu0
  %548 = vmatpush.bf16.msra.mxu0 0
  %549 = vmatpush.bf16.msra.mxu0 0
  %550 = vmatpush.bf16.msra.mxu0 0
  %551 = vmatpush.bf16.msra.mxu0 0
  %552 = vmatpush.bf16.msra.mxu0 0
  %553 = vmatpush.bf16.msra.mxu0 0
  %554 = vmatpush.bf16.msra.mxu0 %v518
  %555 = vmatpush.bf16.msra.mxu0 %v516
  %556 = vmatmul.bf16.gmra.mxu0 %v524
  %v557 = vpop.f32.mrf.mxu0
  %v558 = vadd.f32 0.0, %v557
  %v559 = vpop.f32.mrf.mxu0
  %v560 = vadd.f32 0.0, %v559
  %561 = vmatmul.bf16.gmra.mxu0 %v527
  %v562 = vpop.f32.mrf.mxu0
  %v563 = vadd.f32 0.0, %v562
  %v564 = vpop.f32.mrf.mxu0
  %v565 = vadd.f32 0.0, %v564
  %566 = vdwg.mxu0
  %v567 = vadd.f32 %v461, %v539
  %v568 = vadd.f32 %v462, %v558
  %v569 = vadd.f32 %v463, %v541
  %v570 = vadd.f32 %v464, %v560
  %v571 = vadd.f32 %v465, %v544
  %v572 = vadd.f32 %v466, %v563
  %v573 = vadd.f32 %v467, %v546
  %v574 = vadd.f32 %v468, %v565
  %v575 = vld [vmem:[%s2] sm:$0x3]
  %v577 = vperm.slane %v575, 0
  %v578 = vperm.slane %v575, 1
  %v581 = vadd.f32 %v567, %v577
  %v582 = vadd.f32 %v568, %v578
  %v583 = vadd.f32 %v569, %v577
  %v584 = vadd.f32 %v570, %v578
  %v585 = vadd.f32 %v571, %v577
  %v586 = vadd.f32 %v572, %v578
  %v587 = vadd.f32 %v573, %v577
  %v588 = vadd.f32 %v574, %v578
  %v589 = vmax.f32 %v581, 0.0
  %v590 = vmax.f32 %v582, 0.0
  %v591 = vmax.f32 %v583, 0.0
  %v592 = vmax.f32 %v584, 0.0
  %v593 = vmax.f32 %v585, 0.0
  %v594 = vmax.f32 %v586, 0.0
  %v595 = vmax.f32 %v587, 0.0
  %v596 = vmax.f32 %v588, 0.0
  %v597 = vlaneseq
  %v598 = vshrl.u32 %v597, 7
  %v599 = vadd.s32 %v598, 8
  %v600 = vld [vmem:[%s3] sm:$0x3]
  %v601 = vperm.slane %v600, 0
  %v602 = vperm.slane %v600, 1
  %vm603 = vcmp.lt.s32.totalorder %v598, %v601
  %vm604 = vcmp.lt.s32.totalorder %v598, %v602
  %vm605 = vcmp.lt.s32.totalorder %v599, %v601
  %vm606 = vcmp.lt.s32.totalorder %v599, %v602
  %v607 = vsel %vm603, 1, 0
  %v608 = vsel %vm604, 1, 0
  %v609 = vsel %vm605, 1, 0
  %v610 = vsel %vm606, 1, 0
  %vm611 = vcmp.eq.s32.totalorder %v607, 1
  %vm612 = vcmp.eq.s32.totalorder %v608, 1
  %vm613 = vcmp.eq.s32.totalorder %v609, 1
  %vm614 = vcmp.eq.s32.totalorder %v610, 1
  %v615 = vsel %vm611, %v589, 0.0
  %v616 = vsel %vm612, %v590, 0.0
  %v617 = vsel %vm613, %v591, 0.0
  %v618 = vsel %vm614, %v592, 0.0
  %v619 = vsel %vm611, %v593, 0.0
  %v620 = vsel %vm612, %v594, 0.0
  %v621 = vsel %vm613, %v595, 0.0
  %v622 = vsel %vm614, %v596, 0.0
  %v623 = vmax.f32 %v615, %v617
  %v624 = vrot.slane %v623, 4
  %v625 = vmax.f32 %v623, %v624
  %v626 = vrot.slane %v625, 2
  %v627 = vmax.f32 %v625, %v626
  %v628 = vrot.slane %v627, 1
  %v629 = vmax.f32 %v627, %v628
  %v630 = vmax.f32 %v616, %v618
  %v631 = vrot.slane %v630, 4
  %v632 = vmax.f32 %v630, %v631
  %v633 = vrot.slane %v632, 2
  %v634 = vmax.f32 %v632, %v633
  %v635 = vrot.slane %v634, 1
  %v636 = vmax.f32 %v634, %v635
  %v637 = vmax.f32 %v619, %v621
  %v638 = vrot.slane %v637, 4
  %v639 = vmax.f32 %v637, %v638
  %v640 = vrot.slane %v639, 2
  %v641 = vmax.f32 %v639, %v640
  %v642 = vrot.slane %v641, 1
  %v643 = vmax.f32 %v641, %v642
  %v644 = vmax.f32 %v620, %v622
  %v645 = vrot.slane %v644, 4
  %v646 = vmax.f32 %v644, %v645
  %v647 = vrot.slane %v646, 2
  %v648 = vmax.f32 %v646, %v647
  %v649 = vrot.slane %v648, 1
  %v650 = vmax.f32 %v648, %v649
  %v655 = vrot.slane %v636, 6
  %v656 = vrot.slane %v650, 6
  %vm657 = vcmask 1041408
  %v658 = vsel %vm657, %v629, %v655
  %v659 = vsel %vm657, %v643, %v656
  %vm660 = vcmask 1044484
  %v661 = vsel %vm660, %v658, %v658
  %vm662 = vcmask 1046534
  %v663 = vsel %vm662, %v658, %v661
  %v664 = vrot.slane %v659, 7
  %vm665 = vcmask 1041409
  %v666 = vsel %vm665, %v664, %v663
  %vm667 = vcmask 1043459
  %v668 = vsel %vm667, %v664, %v666
  %vm669 = vcmask 1045509
  %v670 = vsel %vm669, %v664, %v668
  %vm671 = vcmask 1047559
  %v672 = vsel %vm671, %v664, %v670
  %674 = vst [vmem:[%s4] sm:$0xf] %v672
  // Predicated region
  $region18: #{textcnn_forward.1} parent=0 // pred_check
    _
  $region19: #{textcnn_forward.1} parent=0 // pred_check_branch
    %676 = sbr.rel (0) target = $region21
  $region20: #{textcnn_forward.1} parent=0 // pred_region
    _
  $region21: #{textcnn_forward.1} parent=0 // pred_fallthru
    _
  // Predicated region
  $region22: #{textcnn_forward.1} parent=0 // pred_check
    _
  $region23: #{textcnn_forward.1} parent=0 // pred_check_branch
    %678 = sbr.rel (0) target = $region25
  $region24: #{textcnn_forward.1} parent=0 // pred_region
    _
  $region25: #{textcnn_forward.1} parent=0 // pred_fallthru
    _

</llo_original>
